<compile_context>
chip_gen: v6e
topology: v6e:2x2x1
jax: 0.10.0
libtpu: 0.0.40
codegen_flags: <defaults>
</compile_context>

<pallas_src>
import functools

import jax
import jax.numpy as jnp
from jax.experimental import pallas as pl
from jax.experimental.pallas import tpu as pltpu


def _sigmoid(x):
    # sigmoid(x) = 1 / (1 + exp(-x)).  exp and the approximate reciprocal both
    # run in the EUP slot, avoiding a slow VPU divide (matters most on v5e).
    return pl.reciprocal(1.0 + jnp.exp(-x), approx=True)


def _lstm_kernel(px_ref, wh_ref, out_ref, h_scr, c_scr, *, hidden_size, chunk):
    """One grid step = one (batch-tile, time-chunk).

    px_ref : (Bt, Tc, 4H) f32   precomputed x_t @ W_x + b (gate order i,f,g,o)
    wh_ref : (H, 4H)      bf16  fused recurrent weight, resident across steps
    out_ref: (Bt, Tc, H)  f32
    h_scr/c_scr: (Bt, H)  f32   recurrent state, persists across time chunks
    """
    t = pl.program_id(1)

    # Initialize the recurrent state at the first time chunk of each batch tile.
    @pl.when(t == 0)
    def _():
        h_scr[...] = jnp.zeros_like(h_scr)
        c_scr[...] = jnp.zeros_like(c_scr)

    H = hidden_size
    w_h = wh_ref[...]          # (H, 4H) bf16, loaded once per chunk
    h = h_scr[...]             # (Bt, H) f32
    c = c_scr[...]             # (Bt, H) f32

    # Fully unrolled inner time loop (static trip count == chunk); equivalent to
    # lax.fori_loop(..., unroll=True) but keeps every ref index static.  Only the
    # small (Bt, H) x (H, 4H) recurrent matmul is inherently sequential.
    for s in range(chunk):
        gates = px_ref[:, s, :] + jnp.dot(
            h.astype(jnp.bfloat16), w_h, preferred_element_type=jnp.float32)
        # NOTE: for production sizes, make H a multiple of 128 so these gate
        # slices are lane-tile aligned (free on the VPU/XLU).
        i_t = _sigmoid(gates[:, 0 * H:1 * H])
        f_t = _sigmoid(gates[:, 1 * H:2 * H])
        g_t = jnp.tanh(gates[:, 2 * H:3 * H])
        o_t = _sigmoid(gates[:, 3 * H:4 * H])
        c = f_t * c + i_t * g_t
        h = o_t * jnp.tanh(c)
        out_ref[:, s, :] = h.astype(out_ref.dtype)

    h_scr[...] = h
    c_scr[...] = c


def _pick_time_chunk(seq_len, max_chunk=32):
    """Largest multiple-of-8 divisor of seq_len up to max_chunk (keeps the time
    block sublane-aligned); fall back to the full sequence (full-dim block is
    always legal)."""
    for c in range(min(seq_len, max_chunk), 7, -1):
        if seq_len % c == 0 and c % 8 == 0:
            return c
    return seq_len


def _pick_batch_tiles(batch):
    # Two batch tiles let v7x's second TensorCore take half the sequences via
    # the "parallel" grid axis; harmless on single-TC v5e/v6e.
    return 2 if (batch >= 2 and batch % 2 == 0) else 1


def lstm_forward(x, w_x, w_h, b, *, time_chunk=None, batch_tiles=None):
    """x: (batch, seq, input_size) f32.
    w_x: (input_size, 4H), w_h: (H, 4H), b: (1, 4H). Gate order i, f, g, o.
    Returns (batch, seq, H) f32."""
    batch, seq, input_size = x.shape
    hidden_size = w_h.shape[0]
    four_h = 4 * hidden_size

    # (1) Hoist the input projection out of the recurrence: one big, fully
    #     pipelined bf16 MXU matmul over all batch*seq rows, f32 accumulation.
    #     The (summed) bias is folded in here so the kernel only does h @ W_h.
    pre_x = jnp.einsum(
        "bti,ih->bth",
        x.astype(jnp.bfloat16),
        w_x.astype(jnp.bfloat16),
        preferred_element_type=jnp.float32,
    ) + b.astype(jnp.float32)                      # (batch, seq, 4H) f32

    # (2) Chunk the time axis; (3) tile the batch for the parallel grid axis.
    t_chunk = _pick_time_chunk(seq) if time_chunk is None else time_chunk
    assert seq % t_chunk == 0
    n_t = seq // t_chunk
    n_b = _pick_batch_tiles(batch) if batch_tiles is None else batch_tiles
    assert batch % n_b == 0
    b_tile = batch // n_b

    w_h_bf16 = w_h.astype(jnp.bfloat16)            # native MXU dtype, half VMEM

    kernel = functools.partial(_lstm_kernel, hidden_size=hidden_size, chunk=t_chunk)

    return pl.pallas_call(
        kernel,
        out_shape=jax.ShapeDtypeStruct((batch, seq, hidden_size), jnp.float32),
        grid_spec=pltpu.PrefetchScalarGridSpec(
            num_scalar_prefetch=0,
            grid=(n_b, n_t),                       # (parallel batch, sequential time)
            in_specs=[
                # Precomputed gate pre-activations, batch-major (no transposes).
                pl.BlockSpec((b_tile, t_chunk, four_h), lambda bi, ti: (bi, ti, 0)),
                # Constant index_map: fused recurrent weight stays VMEM-resident.
                # TODO(synk): for very large H (v7x's 64 MiB VMEM) tile the 4H
                # axis and/or single-buffer the weight (pl.Buffered(1)).
                pl.BlockSpec((hidden_size, four_h), lambda bi, ti: (0, 0)),
            ],
            out_specs=pl.BlockSpec(
                (b_tile, t_chunk, hidden_size), lambda bi, ti: (bi, ti, 0)),
            scratch_shapes=[
                pltpu.VMEM((b_tile, hidden_size), jnp.float32),  # h state
                pltpu.VMEM((b_tile, hidden_size), jnp.float32),  # c state
            ],
        ),
        compiler_params=pltpu.CompilerParams(
            dimension_semantics=("parallel", "arbitrary"),  # batch parallel, time recurrent
            vmem_limit_bytes=64 * 1024 * 1024,
        ),
    )(pre_x, w_h_bf16)


def _init_params(key, input_size, hidden_size):
    """Deterministic init matching torch.nn.Linear shapes.

    Per-gate: W_i* has shape (H, input_size), W_h* has shape (H, H), biases (H,).
    Fused: w_x = concat([W_ii.T, W_if.T, W_ig.T, W_io.T], axis=1), w_h likewise,
    and b sums the input-side and hidden-side biases per gate.
    """
    keys = jax.random.split(key, 16)
    gates_x, gates_h, biases = [], [], []
    k = 0
    for _ in range(4):  # i, f, g, o
        w_ix = jax.random.normal(keys[k], (hidden_size, input_size), jnp.float32) * 0.1
        b_ix = jax.random.normal(keys[k + 1], (hidden_size,), jnp.float32) * 0.1
        w_hh = jax.random.normal(keys[k + 2], (hidden_size, hidden_size), jnp.float32) * 0.1
        b_hh = jax.random.normal(keys[k + 3], (hidden_size,), jnp.float32) * 0.1
        k += 4
        gates_x.append(w_ix.T)       # (input_size, H)
        gates_h.append(w_hh.T)       # (H, H)
        biases.append(b_ix + b_hh)   # (H,)
    w_x = jnp.concatenate(gates_x, axis=1)            # (input_size, 4H)
    w_h = jnp.concatenate(gates_h, axis=1)            # (H, 4H)
    b = jnp.concatenate(biases, axis=0)[None, :]      # (1, 4H)
    return w_x, w_h, b


def _reference_lstm(x, w_x, w_h, b):
    """Pure-JAX reference mirroring the PyTorch forward loop, with the same
    bf16-operand / f32-accumulate matmuls as the kernel (exact sigmoid)."""
    batch, seq, _ = x.shape
    H = w_h.shape[0]
    x_b = x.astype(jnp.bfloat16)
    w_xb = w_x.astype(jnp.bfloat16)
    w_hb = w_h.astype(jnp.bfloat16)
    h = jnp.zeros((batch, H), jnp.float32)
    c = jnp.zeros((batch, H), jnp.float32)
    outs = []
    for t in range(seq):
        pre = jnp.dot(x_b[:, t, :], w_xb, preferred_element_type=jnp.float32) + b
        gates = pre + jnp.dot(h.astype(jnp.bfloat16), w_hb,
                              preferred_element_type=jnp.float32)
        i_t = jax.nn.sigmoid(gates[:, 0 * H:1 * H])
        f_t = jax.nn.sigmoid(gates[:, 1 * H:2 * H])
        g_t = jnp.tanh(gates[:, 2 * H:3 * H])
        o_t = jax.nn.sigmoid(gates[:, 3 * H:4 * H])
        c = f_t * c + i_t * g_t
        h = o_t * jnp.tanh(c)
        outs.append(h)
    return jnp.stack(outs, axis=1)


if __name__ == "__main__":
    batch, seq, input_size, hidden_size = 2, 8, 16, 32

    key = jax.random.PRNGKey(0)
    k_x, k_p = jax.random.split(key)
    x = jax.random.normal(k_x, (batch, seq, input_size), jnp.float32)
    w_x, w_h, b = _init_params(k_p, input_size, hidden_size)

    out = jax.jit(lstm_forward)(x, w_x, w_h, b)
    out = jax.block_until_ready(out)

    ref = _reference_lstm(x, w_x, w_h, b)
    assert out.shape == (batch, seq, hidden_size)
    max_err = float(jnp.max(jnp.abs(out - ref)))
    # Tolerance accounts for bf16 matmul operands + approximate-reciprocal sigmoid.
    assert jnp.allclose(out, ref, atol=1e-2, rtol=1e-2), (
        f"mismatch vs reference (max abs err {max_err})")

    print("KERNEL_OK")
</pallas_src>

<mosaic_0001>
module attributes {stable_mosaic.version = 11 : i64} {
  func.func @_lstm_kernel(%arg0: i32, %arg1: i32, %arg2: memref<1x8x128xf32, #tpu.memory_space<vmem>>, %arg3: memref<32x128xbf16, #tpu.memory_space<vmem>>, %arg4: memref<1x8x32xf32, #tpu.memory_space<vmem>>, %arg5: memref<1x32xf32, #tpu.memory_space<vmem>>, %arg6: memref<1x32xf32, #tpu.memory_space<vmem>>) attributes {dimension_semantics = [#tpu.dimension_semantics<parallel>, #tpu.dimension_semantics<arbitrary>], iteration_bounds = array<i64: 2, 1>, scalar_prefetch = 0 : i64, scratch_operands = 2 : i64, tpu.core_type = #tpu.core_type<tc>, window_params = [{transform_indices = @transform_0, window_bounds = array<i64: 1, 8, 128>}, {pipeline_mode = #tpu.pipeline_mode<synchronous>, transform_indices = @transform_1, window_bounds = array<i64: 32, 128>}, {transform_indices = @transform_2, window_bounds = array<i64: 1, 8, 32>}]} {
    %c0_i32 = arith.constant 0 : i32
    %0 = arith.cmpi eq, %arg1, %c0_i32 : i32
    %1 = arith.extui %0 : i1 to i32
    %c0_i32_0 = arith.constant 0 : i32
    %2 = arith.cmpi ne, %1, %c0_i32_0 : i32
    scf.if %2 {
      %cst_106 = arith.constant 0.000000e+00 : f32
      %296 = vector.broadcast %cst_106 : f32 to vector<1x32xf32>
      %c0_107 = arith.constant 0 : index
      %c0_108 = arith.constant 0 : index
      %297 = vector.load %arg5[%c0_107, %c0_108] : memref<1x32xf32, #tpu.memory_space<vmem>>, vector<1x32xf32>
      tpu.vector_store %arg5[%c0_107, %c0_108], %296 {strides = array<i32>} : memref<1x32xf32, #tpu.memory_space<vmem>>, vector<1x32xf32>,
      %cst_109 = arith.constant 0.000000e+00 : f32
      %298 = vector.broadcast %cst_109 : f32 to vector<1x32xf32>
      %c0_110 = arith.constant 0 : index
      %c0_111 = arith.constant 0 : index
      %299 = vector.load %arg6[%c0_110, %c0_111] : memref<1x32xf32, #tpu.memory_space<vmem>>, vector<1x32xf32>
      tpu.vector_store %arg6[%c0_110, %c0_111], %298 {strides = array<i32>} : memref<1x32xf32, #tpu.memory_space<vmem>>, vector<1x32xf32>,
    } else {
    }
    %c0 = arith.constant 0 : index
    %c0_1 = arith.constant 0 : index
    %3 = vector.load %arg3[%c0, %c0_1] : memref<32x128xbf16, #tpu.memory_space<vmem>>, vector<32x128xbf16>
    %c0_2 = arith.constant 0 : index
    %c0_3 = arith.constant 0 : index
    %4 = vector.load %arg5[%c0_2, %c0_3] : memref<1x32xf32, #tpu.memory_space<vmem>>, vector<1x32xf32>
    %c0_4 = arith.constant 0 : index
    %c0_5 = arith.constant 0 : index
    %5 = vector.load %arg6[%c0_4, %c0_5] : memref<1x32xf32, #tpu.memory_space<vmem>>, vector<1x32xf32>
    %c0_6 = arith.constant 0 : index
    %c0_7 = arith.constant 0 : index
    %c0_8 = arith.constant 0 : index
    %6 = vector.load %arg2[%c0_6, %c0_7, %c0_8] : memref<1x8x128xf32, #tpu.memory_space<vmem>>, vector<1x1x128xf32>
    %7 = vector.shape_cast %6 : vector<1x1x128xf32> to vector<1x128xf32>
    %8 = arith.truncf %4 : vector<1x32xf32> to vector<1x32xbf16>
    %cst = arith.constant dense<0.000000e+00> : vector<1x128xf32>
    %9 = tpu.matmul %8, %3, %cst {dimension_numbers = #tpu.dot_dimension_numbers<[1], [0], [0], [1], [0, 0, 1, 1], [], []>} : vector<1x32xbf16>, vector<32x128xbf16>, vector<1x128xf32> -> vector<1x128xf32>
    %10 = arith.addf %7, %9 : vector<1x128xf32>
    %11 = vector.extract_strided_slice %10 {offsets = [0, 0], sizes = [1, 32], strides = [1, 1]} : vector<1x128xf32> to vector<1x32xf32>
    %cst_9 = arith.constant 0.000000e+00 : f32
    %12 = vector.broadcast %cst_9 : f32 to vector<1x32xf32>
    %13 = arith.subf %12, %11 : vector<1x32xf32>
    %14 = math.exp %13 : vector<1x32xf32>
    %cst_10 = arith.constant 1.000000e+00 : f32
    %15 = vector.broadcast %cst_10 : f32 to vector<1x32xf32>
    %16 = arith.addf %15, %14 : vector<1x32xf32>
    %17 = tpu.reciprocal %16 {approx = true} : vector<1x32xf32> -> vector<1x32xf32>
    %18 = vector.extract_strided_slice %10 {offsets = [0, 32], sizes = [1, 32], strides = [1, 1]} : vector<1x128xf32> to vector<1x32xf32>
    %cst_11 = arith.constant 0.000000e+00 : f32
    %19 = vector.broadcast %cst_11 : f32 to vector<1x32xf32>
    %20 = arith.subf %19, %18 : vector<1x32xf32>
    %21 = math.exp %20 : vector<1x32xf32>
    %cst_12 = arith.constant 1.000000e+00 : f32
    %22 = vector.broadcast %cst_12 : f32 to vector<1x32xf32>
    %23 = arith.addf %22, %21 : vector<1x32xf32>
    %24 = tpu.reciprocal %23 {approx = true} : vector<1x32xf32> -> vector<1x32xf32>
    %25 = vector.extract_strided_slice %10 {offsets = [0, 64], sizes = [1, 32], strides = [1, 1]} : vector<1x128xf32> to vector<1x32xf32>
    %26 = math.tanh %25 : vector<1x32xf32>
    %27 = vector.extract_strided_slice %10 {offsets = [0, 96], sizes = [1, 32], strides = [1, 1]} : vector<1x128xf32> to vector<1x32xf32>
    %cst_13 = arith.constant 0.000000e+00 : f32
    %28 = vector.broadcast %cst_13 : f32 to vector<1x32xf32>
    %29 = arith.subf %28, %27 : vector<1x32xf32>
    %30 = math.exp %29 : vector<1x32xf32>
    %cst_14 = arith.constant 1.000000e+00 : f32
    %31 = vector.broadcast %cst_14 : f32 to vector<1x32xf32>
    %32 = arith.addf %31, %30 : vector<1x32xf32>
    %33 = tpu.reciprocal %32 {approx = true} : vector<1x32xf32> -> vector<1x32xf32>
    %34 = arith.mulf %24, %5 : vector<1x32xf32>
    %35 = arith.mulf %17, %26 : vector<1x32xf32>
    %36 = arith.addf %34, %35 : vector<1x32xf32>
    %37 = math.tanh %36 : vector<1x32xf32>
    %38 = arith.mulf %33, %37 : vector<1x32xf32>
    %c0_15 = arith.constant 0 : index
    %c0_16 = arith.constant 0 : index
    %c0_17 = arith.constant 0 : index
    %39 = vector.load %arg4[%c0_15, %c0_16, %c0_17] : memref<1x8x32xf32, #tpu.memory_space<vmem>>, vector<1x1x32xf32>
    %40 = vector.shape_cast %39 : vector<1x1x32xf32> to vector<1x32xf32>
    %41 = vector.shape_cast %38 : vector<1x32xf32> to vector<1x1x32xf32>
    tpu.vector_store %arg4[%c0_15, %c0_16, %c0_17], %41 {strides = array<i32>} : memref<1x8x32xf32, #tpu.memory_space<vmem>>, vector<1x1x32xf32>,
    %c0_18 = arith.constant 0 : index
    %c1 = arith.constant 1 : index
    %c0_19 = arith.constant 0 : index
    %42 = vector.load %arg2[%c0_18, %c1, %c0_19] : memref<1x8x128xf32, #tpu.memory_space<vmem>>, vector<1x1x128xf32>
    %43 = vector.shape_cast %42 : vector<1x1x128xf32> to vector<1x128xf32>
    %44 = arith.truncf %38 : vector<1x32xf32> to vector<1x32xbf16>
    %cst_20 = arith.constant dense<0.000000e+00> : vector<1x128xf32>
    %45 = tpu.matmul %44, %3, %cst_20 {dimension_numbers = #tpu.dot_dimension_numbers<[1], [0], [0], [1], [0, 0, 1, 1], [], []>} : vector<1x32xbf16>, vector<32x128xbf16>, vector<1x128xf32> -> vector<1x128xf32>
    %46 = arith.addf %43, %45 : vector<1x128xf32>
    %47 = vector.extract_strided_slice %46 {offsets = [0, 0], sizes = [1, 32], strides = [1, 1]} : vector<1x128xf32> to vector<1x32xf32>
    %cst_21 = arith.constant 0.000000e+00 : f32
    %48 = vector.broadcast %cst_21 : f32 to vector<1x32xf32>
    %49 = arith.subf %48, %47 : vector<1x32xf32>
    %50 = math.exp %49 : vector<1x32xf32>
    %cst_22 = arith.constant 1.000000e+00 : f32
    %51 = vector.broadcast %cst_22 : f32 to vector<1x32xf32>
    %52 = arith.addf %51, %50 : vector<1x32xf32>
    %53 = tpu.reciprocal %52 {approx = true} : vector<1x32xf32> -> vector<1x32xf32>
    %54 = vector.extract_strided_slice %46 {offsets = [0, 32], sizes = [1, 32], strides = [1, 1]} : vector<1x128xf32> to vector<1x32xf32>
    %cst_23 = arith.constant 0.000000e+00 : f32
    %55 = vector.broadcast %cst_23 : f32 to vector<1x32xf32>
    %56 = arith.subf %55, %54 : vector<1x32xf32>
    %57 = math.exp %56 : vector<1x32xf32>
    %cst_24 = arith.constant 1.000000e+00 : f32
    %58 = vector.broadcast %cst_24 : f32 to vector<1x32xf32>
    %59 = arith.addf %58, %57 : vector<1x32xf32>
    %60 = tpu.reciprocal %59 {approx = true} : vector<1x32xf32> -> vector<1x32xf32>
    %61 = vector.extract_strided_slice %46 {offsets = [0, 64], sizes = [1, 32], strides = [1, 1]} : vector<1x128xf32> to vector<1x32xf32>
    %62 = math.tanh %61 : vector<1x32xf32>
    %63 = vector.extract_strided_slice %46 {offsets = [0, 96], sizes = [1, 32], strides = [1, 1]} : vector<1x128xf32> to vector<1x32xf32>
    %cst_25 = arith.constant 0.000000e+00 : f32
    %64 = vector.broadcast %cst_25 : f32 to vector<1x32xf32>
    %65 = arith.subf %64, %63 : vector<1x32xf32>
    %66 = math.exp %65 : vector<1x32xf32>
    %cst_26 = arith.constant 1.000000e+00 : f32
    %67 = vector.broadcast %cst_26 : f32 to vector<1x32xf32>
    %68 = arith.addf %67, %66 : vector<1x32xf32>
    %69 = tpu.reciprocal %68 {approx = true} : vector<1x32xf32> -> vector<1x32xf32>
    %70 = arith.mulf %60, %36 : vector<1x32xf32>
    %71 = arith.mulf %53, %62 : vector<1x32xf32>
    %72 = arith.addf %70, %71 : vector<1x32xf32>
    %73 = math.tanh %72 : vector<1x32xf32>
    %74 = arith.mulf %69, %73 : vector<1x32xf32>
    %c0_27 = arith.constant 0 : index
    %c1_28 = arith.constant 1 : index
    %c0_29 = arith.constant 0 : index
    %75 = vector.load %arg4[%c0_27, %c1_28, %c0_29] : memref<1x8x32xf32, #tpu.memory_space<vmem>>, vector<1x1x32xf32>
    %76 = vector.shape_cast %75 : vector<1x1x32xf32> to vector<1x32xf32>
    %77 = vector.shape_cast %74 : vector<1x32xf32> to vector<1x1x32xf32>
    tpu.vector_store %arg4[%c0_27, %c1_28, %c0_29], %77 {strides = array<i32>} : memref<1x8x32xf32, #tpu.memory_space<vmem>>, vector<1x1x32xf32>,
    %c0_30 = arith.constant 0 : index
    %c2 = arith.constant 2 : index
    %c0_31 = arith.constant 0 : index
    %78 = vector.load %arg2[%c0_30, %c2, %c0_31] : memref<1x8x128xf32, #tpu.memory_space<vmem>>, vector<1x1x128xf32>
    %79 = vector.shape_cast %78 : vector<1x1x128xf32> to vector<1x128xf32>
    %80 = arith.truncf %74 : vector<1x32xf32> to vector<1x32xbf16>
    %cst_32 = arith.constant dense<0.000000e+00> : vector<1x128xf32>
    %81 = tpu.matmul %80, %3, %cst_32 {dimension_numbers = #tpu.dot_dimension_numbers<[1], [0], [0], [1], [0, 0, 1, 1], [], []>} : vector<1x32xbf16>, vector<32x128xbf16>, vector<1x128xf32> -> vector<1x128xf32>
    %82 = arith.addf %79, %81 : vector<1x128xf32>
    %83 = vector.extract_strided_slice %82 {offsets = [0, 0], sizes = [1, 32], strides = [1, 1]} : vector<1x128xf32> to vector<1x32xf32>
    %cst_33 = arith.constant 0.000000e+00 : f32
    %84 = vector.broadcast %cst_33 : f32 to vector<1x32xf32>
    %85 = arith.subf %84, %83 : vector<1x32xf32>
    %86 = math.exp %85 : vector<1x32xf32>
    %cst_34 = arith.constant 1.000000e+00 : f32
    %87 = vector.broadcast %cst_34 : f32 to vector<1x32xf32>
    %88 = arith.addf %87, %86 : vector<1x32xf32>
    %89 = tpu.reciprocal %88 {approx = true} : vector<1x32xf32> -> vector<1x32xf32>
    %90 = vector.extract_strided_slice %82 {offsets = [0, 32], sizes = [1, 32], strides = [1, 1]} : vector<1x128xf32> to vector<1x32xf32>
    %cst_35 = arith.constant 0.000000e+00 : f32
    %91 = vector.broadcast %cst_35 : f32 to vector<1x32xf32>
    %92 = arith.subf %91, %90 : vector<1x32xf32>
    %93 = math.exp %92 : vector<1x32xf32>
    %cst_36 = arith.constant 1.000000e+00 : f32
    %94 = vector.broadcast %cst_36 : f32 to vector<1x32xf32>
    %95 = arith.addf %94, %93 : vector<1x32xf32>
    %96 = tpu.reciprocal %95 {approx = true} : vector<1x32xf32> -> vector<1x32xf32>
    %97 = vector.extract_strided_slice %82 {offsets = [0, 64], sizes = [1, 32], strides = [1, 1]} : vector<1x128xf32> to vector<1x32xf32>
    %98 = math.tanh %97 : vector<1x32xf32>
    %99 = vector.extract_strided_slice %82 {offsets = [0, 96], sizes = [1, 32], strides = [1, 1]} : vector<1x128xf32> to vector<1x32xf32>
    %cst_37 = arith.constant 0.000000e+00 : f32
    %100 = vector.broadcast %cst_37 : f32 to vector<1x32xf32>
    %101 = arith.subf %100, %99 : vector<1x32xf32>
    %102 = math.exp %101 : vector<1x32xf32>
    %cst_38 = arith.constant 1.000000e+00 : f32
    %103 = vector.broadcast %cst_38 : f32 to vector<1x32xf32>
    %104 = arith.addf %103, %102 : vector<1x32xf32>
    %105 = tpu.reciprocal %104 {approx = true} : vector<1x32xf32> -> vector<1x32xf32>
    %106 = arith.mulf %96, %72 : vector<1x32xf32>
    %107 = arith.mulf %89, %98 : vector<1x32xf32>
    %108 = arith.addf %106, %107 : vector<1x32xf32>
    %109 = math.tanh %108 : vector<1x32xf32>
    %110 = arith.mulf %105, %109 : vector<1x32xf32>
    %c0_39 = arith.constant 0 : index
    %c2_40 = arith.constant 2 : index
    %c0_41 = arith.constant 0 : index
    %111 = vector.load %arg4[%c0_39, %c2_40, %c0_41] : memref<1x8x32xf32, #tpu.memory_space<vmem>>, vector<1x1x32xf32>
    %112 = vector.shape_cast %111 : vector<1x1x32xf32> to vector<1x32xf32>
    %113 = vector.shape_cast %110 : vector<1x32xf32> to vector<1x1x32xf32>
    tpu.vector_store %arg4[%c0_39, %c2_40, %c0_41], %113 {strides = array<i32>} : memref<1x8x32xf32, #tpu.memory_space<vmem>>, vector<1x1x32xf32>,
    %c0_42 = arith.constant 0 : index
    %c3 = arith.constant 3 : index
    %c0_43 = arith.constant 0 : index
    %114 = vector.load %arg2[%c0_42, %c3, %c0_43] : memref<1x8x128xf32, #tpu.memory_space<vmem>>, vector<1x1x128xf32>
    %115 = vector.shape_cast %114 : vector<1x1x128xf32> to vector<1x128xf32>
    %116 = arith.truncf %110 : vector<1x32xf32> to vector<1x32xbf16>
    %cst_44 = arith.constant dense<0.000000e+00> : vector<1x128xf32>
    %117 = tpu.matmul %116, %3, %cst_44 {dimension_numbers = #tpu.dot_dimension_numbers<[1], [0], [0], [1], [0, 0, 1, 1], [], []>} : vector<1x32xbf16>, vector<32x128xbf16>, vector<1x128xf32> -> vector<1x128xf32>
    %118 = arith.addf %115, %117 : vector<1x128xf32>
    %119 = vector.extract_strided_slice %118 {offsets = [0, 0], sizes = [1, 32], strides = [1, 1]} : vector<1x128xf32> to vector<1x32xf32>
    %cst_45 = arith.constant 0.000000e+00 : f32
    %120 = vector.broadcast %cst_45 : f32 to vector<1x32xf32>
    %121 = arith.subf %120, %119 : vector<1x32xf32>
    %122 = math.exp %121 : vector<1x32xf32>
    %cst_46 = arith.constant 1.000000e+00 : f32
    %123 = vector.broadcast %cst_46 : f32 to vector<1x32xf32>
    %124 = arith.addf %123, %122 : vector<1x32xf32>
    %125 = tpu.reciprocal %124 {approx = true} : vector<1x32xf32> -> vector<1x32xf32>
    %126 = vector.extract_strided_slice %118 {offsets = [0, 32], sizes = [1, 32], strides = [1, 1]} : vector<1x128xf32> to vector<1x32xf32>
    %cst_47 = arith.constant 0.000000e+00 : f32
    %127 = vector.broadcast %cst_47 : f32 to vector<1x32xf32>
    %128 = arith.subf %127, %126 : vector<1x32xf32>
    %129 = math.exp %128 : vector<1x32xf32>
    %cst_48 = arith.constant 1.000000e+00 : f32
    %130 = vector.broadcast %cst_48 : f32 to vector<1x32xf32>
    %131 = arith.addf %130, %129 : vector<1x32xf32>
    %132 = tpu.reciprocal %131 {approx = true} : vector<1x32xf32> -> vector<1x32xf32>
    %133 = vector.extract_strided_slice %118 {offsets = [0, 64], sizes = [1, 32], strides = [1, 1]} : vector<1x128xf32> to vector<1x32xf32>
    %134 = math.tanh %133 : vector<1x32xf32>
    %135 = vector.extract_strided_slice %118 {offsets = [0, 96], sizes = [1, 32], strides = [1, 1]} : vector<1x128xf32> to vector<1x32xf32>
    %cst_49 = arith.constant 0.000000e+00 : f32
    %136 = vector.broadcast %cst_49 : f32 to vector<1x32xf32>
    %137 = arith.subf %136, %135 : vector<1x32xf32>
    %138 = math.exp %137 : vector<1x32xf32>
    %cst_50 = arith.constant 1.000000e+00 : f32
    %139 = vector.broadcast %cst_50 : f32 to vector<1x32xf32>
    %140 = arith.addf %139, %138 : vector<1x32xf32>
    %141 = tpu.reciprocal %140 {approx = true} : vector<1x32xf32> -> vector<1x32xf32>
    %142 = arith.mulf %132, %108 : vector<1x32xf32>
    %143 = arith.mulf %125, %134 : vector<1x32xf32>
    %144 = arith.addf %142, %143 : vector<1x32xf32>
    %145 = math.tanh %144 : vector<1x32xf32>
    %146 = arith.mulf %141, %145 : vector<1x32xf32>
    %c0_51 = arith.constant 0 : index
    %c3_52 = arith.constant 3 : index
    %c0_53 = arith.constant 0 : index
    %147 = vector.load %arg4[%c0_51, %c3_52, %c0_53] : memref<1x8x32xf32, #tpu.memory_space<vmem>>, vector<1x1x32xf32>
    %148 = vector.shape_cast %147 : vector<1x1x32xf32> to vector<1x32xf32>
    %149 = vector.shape_cast %146 : vector<1x32xf32> to vector<1x1x32xf32>
    tpu.vector_store %arg4[%c0_51, %c3_52, %c0_53], %149 {strides = array<i32>} : memref<1x8x32xf32, #tpu.memory_space<vmem>>, vector<1x1x32xf32>,
    %c0_54 = arith.constant 0 : index
    %c4 = arith.constant 4 : index
    %c0_55 = arith.constant 0 : index
    %150 = vector.load %arg2[%c0_54, %c4, %c0_55] : memref<1x8x128xf32, #tpu.memory_space<vmem>>, vector<1x1x128xf32>
    %151 = vector.shape_cast %150 : vector<1x1x128xf32> to vector<1x128xf32>
    %152 = arith.truncf %146 : vector<1x32xf32> to vector<1x32xbf16>
    %cst_56 = arith.constant dense<0.000000e+00> : vector<1x128xf32>
    %153 = tpu.matmul %152, %3, %cst_56 {dimension_numbers = #tpu.dot_dimension_numbers<[1], [0], [0], [1], [0, 0, 1, 1], [], []>} : vector<1x32xbf16>, vector<32x128xbf16>, vector<1x128xf32> -> vector<1x128xf32>
    %154 = arith.addf %151, %153 : vector<1x128xf32>
    %155 = vector.extract_strided_slice %154 {offsets = [0, 0], sizes = [1, 32], strides = [1, 1]} : vector<1x128xf32> to vector<1x32xf32>
    %cst_57 = arith.constant 0.000000e+00 : f32
    %156 = vector.broadcast %cst_57 : f32 to vector<1x32xf32>
    %157 = arith.subf %156, %155 : vector<1x32xf32>
    %158 = math.exp %157 : vector<1x32xf32>
    %cst_58 = arith.constant 1.000000e+00 : f32
    %159 = vector.broadcast %cst_58 : f32 to vector<1x32xf32>
    %160 = arith.addf %159, %158 : vector<1x32xf32>
    %161 = tpu.reciprocal %160 {approx = true} : vector<1x32xf32> -> vector<1x32xf32>
    %162 = vector.extract_strided_slice %154 {offsets = [0, 32], sizes = [1, 32], strides = [1, 1]} : vector<1x128xf32> to vector<1x32xf32>
    %cst_59 = arith.constant 0.000000e+00 : f32
    %163 = vector.broadcast %cst_59 : f32 to vector<1x32xf32>
    %164 = arith.subf %163, %162 : vector<1x32xf32>
    %165 = math.exp %164 : vector<1x32xf32>
    %cst_60 = arith.constant 1.000000e+00 : f32
    %166 = vector.broadcast %cst_60 : f32 to vector<1x32xf32>
    %167 = arith.addf %166, %165 : vector<1x32xf32>
    %168 = tpu.reciprocal %167 {approx = true} : vector<1x32xf32> -> vector<1x32xf32>
    %169 = vector.extract_strided_slice %154 {offsets = [0, 64], sizes = [1, 32], strides = [1, 1]} : vector<1x128xf32> to vector<1x32xf32>
    %170 = math.tanh %169 : vector<1x32xf32>
    %171 = vector.extract_strided_slice %154 {offsets = [0, 96], sizes = [1, 32], strides = [1, 1]} : vector<1x128xf32> to vector<1x32xf32>
    %cst_61 = arith.constant 0.000000e+00 : f32
    %172 = vector.broadcast %cst_61 : f32 to vector<1x32xf32>
    %173 = arith.subf %172, %171 : vector<1x32xf32>
    %174 = math.exp %173 : vector<1x32xf32>
    %cst_62 = arith.constant 1.000000e+00 : f32
    %175 = vector.broadcast %cst_62 : f32 to vector<1x32xf32>
    %176 = arith.addf %175, %174 : vector<1x32xf32>
    %177 = tpu.reciprocal %176 {approx = true} : vector<1x32xf32> -> vector<1x32xf32>
    %178 = arith.mulf %168, %144 : vector<1x32xf32>
    %179 = arith.mulf %161, %170 : vector<1x32xf32>
    %180 = arith.addf %178, %179 : vector<1x32xf32>
    %181 = math.tanh %180 : vector<1x32xf32>
    %182 = arith.mulf %177, %181 : vector<1x32xf32>
    %c0_63 = arith.constant 0 : index
    %c4_64 = arith.constant 4 : index
    %c0_65 = arith.constant 0 : index
    %183 = vector.load %arg4[%c0_63, %c4_64, %c0_65] : memref<1x8x32xf32, #tpu.memory_space<vmem>>, vector<1x1x32xf32>
    %184 = vector.shape_cast %183 : vector<1x1x32xf32> to vector<1x32xf32>
    %185 = vector.shape_cast %182 : vector<1x32xf32> to vector<1x1x32xf32>
    tpu.vector_store %arg4[%c0_63, %c4_64, %c0_65], %185 {strides = array<i32>} : memref<1x8x32xf32, #tpu.memory_space<vmem>>, vector<1x1x32xf32>,
    %c0_66 = arith.constant 0 : index
    %c5 = arith.constant 5 : index
    %c0_67 = arith.constant 0 : index
    %186 = vector.load %arg2[%c0_66, %c5, %c0_67] : memref<1x8x128xf32, #tpu.memory_space<vmem>>, vector<1x1x128xf32>
    %187 = vector.shape_cast %186 : vector<1x1x128xf32> to vector<1x128xf32>
    %188 = arith.truncf %182 : vector<1x32xf32> to vector<1x32xbf16>
    %cst_68 = arith.constant dense<0.000000e+00> : vector<1x128xf32>
    %189 = tpu.matmul %188, %3, %cst_68 {dimension_numbers = #tpu.dot_dimension_numbers<[1], [0], [0], [1], [0, 0, 1, 1], [], []>} : vector<1x32xbf16>, vector<32x128xbf16>, vector<1x128xf32> -> vector<1x128xf32>
    %190 = arith.addf %187, %189 : vector<1x128xf32>
    %191 = vector.extract_strided_slice %190 {offsets = [0, 0], sizes = [1, 32], strides = [1, 1]} : vector<1x128xf32> to vector<1x32xf32>
    %cst_69 = arith.constant 0.000000e+00 : f32
    %192 = vector.broadcast %cst_69 : f32 to vector<1x32xf32>
    %193 = arith.subf %192, %191 : vector<1x32xf32>
    %194 = math.exp %193 : vector<1x32xf32>
    %cst_70 = arith.constant 1.000000e+00 : f32
    %195 = vector.broadcast %cst_70 : f32 to vector<1x32xf32>
    %196 = arith.addf %195, %194 : vector<1x32xf32>
    %197 = tpu.reciprocal %196 {approx = true} : vector<1x32xf32> -> vector<1x32xf32>
    %198 = vector.extract_strided_slice %190 {offsets = [0, 32], sizes = [1, 32], strides = [1, 1]} : vector<1x128xf32> to vector<1x32xf32>
    %cst_71 = arith.constant 0.000000e+00 : f32
    %199 = vector.broadcast %cst_71 : f32 to vector<1x32xf32>
    %200 = arith.subf %199, %198 : vector<1x32xf32>
    %201 = math.exp %200 : vector<1x32xf32>
    %cst_72 = arith.constant 1.000000e+00 : f32
    %202 = vector.broadcast %cst_72 : f32 to vector<1x32xf32>
    %203 = arith.addf %202, %201 : vector<1x32xf32>
    %204 = tpu.reciprocal %203 {approx = true} : vector<1x32xf32> -> vector<1x32xf32>
    %205 = vector.extract_strided_slice %190 {offsets = [0, 64], sizes = [1, 32], strides = [1, 1]} : vector<1x128xf32> to vector<1x32xf32>
    %206 = math.tanh %205 : vector<1x32xf32>
    %207 = vector.extract_strided_slice %190 {offsets = [0, 96], sizes = [1, 32], strides = [1, 1]} : vector<1x128xf32> to vector<1x32xf32>
    %cst_73 = arith.constant 0.000000e+00 : f32
    %208 = vector.broadcast %cst_73 : f32 to vector<1x32xf32>
    %209 = arith.subf %208, %207 : vector<1x32xf32>
    %210 = math.exp %209 : vector<1x32xf32>
    %cst_74 = arith.constant 1.000000e+00 : f32
    %211 = vector.broadcast %cst_74 : f32 to vector<1x32xf32>
    %212 = arith.addf %211, %210 : vector<1x32xf32>
    %213 = tpu.reciprocal %212 {approx = true} : vector<1x32xf32> -> vector<1x32xf32>
    %214 = arith.mulf %204, %180 : vector<1x32xf32>
    %215 = arith.mulf %197, %206 : vector<1x32xf32>
    %216 = arith.addf %214, %215 : vector<1x32xf32>
    %217 = math.tanh %216 : vector<1x32xf32>
    %218 = arith.mulf %213, %217 : vector<1x32xf32>
    %c0_75 = arith.constant 0 : index
    %c5_76 = arith.constant 5 : index
    %c0_77 = arith.constant 0 : index
    %219 = vector.load %arg4[%c0_75, %c5_76, %c0_77] : memref<1x8x32xf32, #tpu.memory_space<vmem>>, vector<1x1x32xf32>
    %220 = vector.shape_cast %219 : vector<1x1x32xf32> to vector<1x32xf32>
    %221 = vector.shape_cast %218 : vector<1x32xf32> to vector<1x1x32xf32>
    tpu.vector_store %arg4[%c0_75, %c5_76, %c0_77], %221 {strides = array<i32>} : memref<1x8x32xf32, #tpu.memory_space<vmem>>, vector<1x1x32xf32>,
    %c0_78 = arith.constant 0 : index
    %c6 = arith.constant 6 : index
    %c0_79 = arith.constant 0 : index
    %222 = vector.load %arg2[%c0_78, %c6, %c0_79] : memref<1x8x128xf32, #tpu.memory_space<vmem>>, vector<1x1x128xf32>
    %223 = vector.shape_cast %222 : vector<1x1x128xf32> to vector<1x128xf32>
    %224 = arith.truncf %218 : vector<1x32xf32> to vector<1x32xbf16>
    %cst_80 = arith.constant dense<0.000000e+00> : vector<1x128xf32>
    %225 = tpu.matmul %224, %3, %cst_80 {dimension_numbers = #tpu.dot_dimension_numbers<[1], [0], [0], [1], [0, 0, 1, 1], [], []>} : vector<1x32xbf16>, vector<32x128xbf16>, vector<1x128xf32> -> vector<1x128xf32>
    %226 = arith.addf %223, %225 : vector<1x128xf32>
    %227 = vector.extract_strided_slice %226 {offsets = [0, 0], sizes = [1, 32], strides = [1, 1]} : vector<1x128xf32> to vector<1x32xf32>
    %cst_81 = arith.constant 0.000000e+00 : f32
    %228 = vector.broadcast %cst_81 : f32 to vector<1x32xf32>
    %229 = arith.subf %228, %227 : vector<1x32xf32>
    %230 = math.exp %229 : vector<1x32xf32>
    %cst_82 = arith.constant 1.000000e+00 : f32
    %231 = vector.broadcast %cst_82 : f32 to vector<1x32xf32>
    %232 = arith.addf %231, %230 : vector<1x32xf32>
    %233 = tpu.reciprocal %232 {approx = true} : vector<1x32xf32> -> vector<1x32xf32>
    %234 = vector.extract_strided_slice %226 {offsets = [0, 32], sizes = [1, 32], strides = [1, 1]} : vector<1x128xf32> to vector<1x32xf32>
    %cst_83 = arith.constant 0.000000e+00 : f32
    %235 = vector.broadcast %cst_83 : f32 to vector<1x32xf32>
    %236 = arith.subf %235, %234 : vector<1x32xf32>
    %237 = math.exp %236 : vector<1x32xf32>
    %cst_84 = arith.constant 1.000000e+00 : f32
    %238 = vector.broadcast %cst_84 : f32 to vector<1x32xf32>
    %239 = arith.addf %238, %237 : vector<1x32xf32>
    %240 = tpu.reciprocal %239 {approx = true} : vector<1x32xf32> -> vector<1x32xf32>
    %241 = vector.extract_strided_slice %226 {offsets = [0, 64], sizes = [1, 32], strides = [1, 1]} : vector<1x128xf32> to vector<1x32xf32>
    %242 = math.tanh %241 : vector<1x32xf32>
    %243 = vector.extract_strided_slice %226 {offsets = [0, 96], sizes = [1, 32], strides = [1, 1]} : vector<1x128xf32> to vector<1x32xf32>
    %cst_85 = arith.constant 0.000000e+00 : f32
    %244 = vector.broadcast %cst_85 : f32 to vector<1x32xf32>
    %245 = arith.subf %244, %243 : vector<1x32xf32>
    %246 = math.exp %245 : vector<1x32xf32>
    %cst_86 = arith.constant 1.000000e+00 : f32
    %247 = vector.broadcast %cst_86 : f32 to vector<1x32xf32>
    %248 = arith.addf %247, %246 : vector<1x32xf32>
    %249 = tpu.reciprocal %248 {approx = true} : vector<1x32xf32> -> vector<1x32xf32>
    %250 = arith.mulf %240, %216 : vector<1x32xf32>
    %251 = arith.mulf %233, %242 : vector<1x32xf32>
    %252 = arith.addf %250, %251 : vector<1x32xf32>
    %253 = math.tanh %252 : vector<1x32xf32>
    %254 = arith.mulf %249, %253 : vector<1x32xf32>
    %c0_87 = arith.constant 0 : index
    %c6_88 = arith.constant 6 : index
    %c0_89 = arith.constant 0 : index
    %255 = vector.load %arg4[%c0_87, %c6_88, %c0_89] : memref<1x8x32xf32, #tpu.memory_space<vmem>>, vector<1x1x32xf32>
    %256 = vector.shape_cast %255 : vector<1x1x32xf32> to vector<1x32xf32>
    %257 = vector.shape_cast %254 : vector<1x32xf32> to vector<1x1x32xf32>
    tpu.vector_store %arg4[%c0_87, %c6_88, %c0_89], %257 {strides = array<i32>} : memref<1x8x32xf32, #tpu.memory_space<vmem>>, vector<1x1x32xf32>,
    %c0_90 = arith.constant 0 : index
    %c7 = arith.constant 7 : index
    %c0_91 = arith.constant 0 : index
    %258 = vector.load %arg2[%c0_90, %c7, %c0_91] : memref<1x8x128xf32, #tpu.memory_space<vmem>>, vector<1x1x128xf32>
    %259 = vector.shape_cast %258 : vector<1x1x128xf32> to vector<1x128xf32>
    %260 = arith.truncf %254 : vector<1x32xf32> to vector<1x32xbf16>
    %cst_92 = arith.constant dense<0.000000e+00> : vector<1x128xf32>
    %261 = tpu.matmul %260, %3, %cst_92 {dimension_numbers = #tpu.dot_dimension_numbers<[1], [0], [0], [1], [0, 0, 1, 1], [], []>} : vector<1x32xbf16>, vector<32x128xbf16>, vector<1x128xf32> -> vector<1x128xf32>
    %262 = arith.addf %259, %261 : vector<1x128xf32>
    %263 = vector.extract_strided_slice %262 {offsets = [0, 0], sizes = [1, 32], strides = [1, 1]} : vector<1x128xf32> to vector<1x32xf32>
    %cst_93 = arith.constant 0.000000e+00 : f32
    %264 = vector.broadcast %cst_93 : f32 to vector<1x32xf32>
    %265 = arith.subf %264, %263 : vector<1x32xf32>
    %266 = math.exp %265 : vector<1x32xf32>
    %cst_94 = arith.constant 1.000000e+00 : f32
    %267 = vector.broadcast %cst_94 : f32 to vector<1x32xf32>
    %268 = arith.addf %267, %266 : vector<1x32xf32>
    %269 = tpu.reciprocal %268 {approx = true} : vector<1x32xf32> -> vector<1x32xf32>
    %270 = vector.extract_strided_slice %262 {offsets = [0, 32], sizes = [1, 32], strides = [1, 1]} : vector<1x128xf32> to vector<1x32xf32>
    %cst_95 = arith.constant 0.000000e+00 : f32
    %271 = vector.broadcast %cst_95 : f32 to vector<1x32xf32>
    %272 = arith.subf %271, %270 : vector<1x32xf32>
    %273 = math.exp %272 : vector<1x32xf32>
    %cst_96 = arith.constant 1.000000e+00 : f32
    %274 = vector.broadcast %cst_96 : f32 to vector<1x32xf32>
    %275 = arith.addf %274, %273 : vector<1x32xf32>
    %276 = tpu.reciprocal %275 {approx = true} : vector<1x32xf32> -> vector<1x32xf32>
    %277 = vector.extract_strided_slice %262 {offsets = [0, 64], sizes = [1, 32], strides = [1, 1]} : vector<1x128xf32> to vector<1x32xf32>
    %278 = math.tanh %277 : vector<1x32xf32>
    %279 = vector.extract_strided_slice %262 {offsets = [0, 96], sizes = [1, 32], strides = [1, 1]} : vector<1x128xf32> to vector<1x32xf32>
    %cst_97 = arith.constant 0.000000e+00 : f32
    %280 = vector.broadcast %cst_97 : f32 to vector<1x32xf32>
    %281 = arith.subf %280, %279 : vector<1x32xf32>
    %282 = math.exp %281 : vector<1x32xf32>
    %cst_98 = arith.constant 1.000000e+00 : f32
    %283 = vector.broadcast %cst_98 : f32 to vector<1x32xf32>
    %284 = arith.addf %283, %282 : vector<1x32xf32>
    %285 = tpu.reciprocal %284 {approx = true} : vector<1x32xf32> -> vector<1x32xf32>
    %286 = arith.mulf %276, %252 : vector<1x32xf32>
    %287 = arith.mulf %269, %278 : vector<1x32xf32>
    %288 = arith.addf %286, %287 : vector<1x32xf32>
    %289 = math.tanh %288 : vector<1x32xf32>
    %290 = arith.mulf %285, %289 : vector<1x32xf32>
    %c0_99 = arith.constant 0 : index
    %c7_100 = arith.constant 7 : index
    %c0_101 = arith.constant 0 : index
    %291 = vector.load %arg4[%c0_99, %c7_100, %c0_101] : memref<1x8x32xf32, #tpu.memory_space<vmem>>, vector<1x1x32xf32>
    %292 = vector.shape_cast %291 : vector<1x1x32xf32> to vector<1x32xf32>
    %293 = vector.shape_cast %290 : vector<1x32xf32> to vector<1x1x32xf32>
    tpu.vector_store %arg4[%c0_99, %c7_100, %c0_101], %293 {strides = array<i32>} : memref<1x8x32xf32, #tpu.memory_space<vmem>>, vector<1x1x32xf32>,
    %c0_102 = arith.constant 0 : index
    %c0_103 = arith.constant 0 : index
    %294 = vector.load %arg5[%c0_102, %c0_103] : memref<1x32xf32, #tpu.memory_space<vmem>>, vector<1x32xf32>
    tpu.vector_store %arg5[%c0_102, %c0_103], %290 {strides = array<i32>} : memref<1x32xf32, #tpu.memory_space<vmem>>, vector<1x32xf32>,
    %c0_104 = arith.constant 0 : index
    %c0_105 = arith.constant 0 : index
    %295 = vector.load %arg6[%c0_104, %c0_105] : memref<1x32xf32, #tpu.memory_space<vmem>>, vector<1x32xf32>
    tpu.vector_store %arg6[%c0_104, %c0_105], %288 {strides = array<i32>} : memref<1x32xf32, #tpu.memory_space<vmem>>, vector<1x32xf32>,
    return
  }
  func.func @transform_0(%arg0: i32, %arg1: i32) -> (i32, i32, i32) {
    %c0_i32 = arith.constant 0 : i32
    %c0_i32_0 = arith.constant 0 : i32
    return %arg0, %arg1, %c0_i32 : i32, i32, i32
  }
  func.func @transform_1(%arg0: i32, %arg1: i32) -> (i32, i32) {
    %c0_i32 = arith.constant 0 : i32
    %c0_i32_0 = arith.constant 0 : i32
    %c0_i32_1 = arith.constant 0 : i32
    return %c0_i32, %c0_i32_0 : i32, i32
  }
  func.func @transform_2(%arg0: i32, %arg1: i32) -> (i32, i32, i32) {
    %c0_i32 = arith.constant 0 : i32
    %c0_i32_0 = arith.constant 0 : i32
    return %arg0, %arg1, %c0_i32 : i32, i32, i32
  }
}

</mosaic_0001>

<llo_original>
// kernel: lstm_forward.1
$region0: #{lstm_forward.1}
  #allocation0 [shape = 'u32[]', space=smem, size = 0x4, offset = 0x4, fixed_abs, tag = 'smem constant byte address 0x4 - core index']
  #allocation1 [shape = 'u32[144,128]{1,0:T(1,128)}', space=vmem, size = 0x12000, scoped, tag = 'internal scratch']
  #allocation2 [shape = 'f32[1,32]{1,0:T(1,128)}', space=vmem, size = 0x200, scoped, tag = 'scratch operand']
  #allocation3 [shape = 'f32[1,32]{1,0:T(1,128)}', space=vmem, size = 0x200, scoped, tag = 'scratch operand']
  %s0 = inlined_call_operand.vmem [shape: f32[2,8,128], index: 0, kind: input, shape index: {}]
  %s1 = inlined_call_operand.vmem [shape: bf16[32,128], index: 1, kind: input, shape index: {}]
  %s2 = inlined_call_operand.hbm [shape: f32[2,8,32], index: 2, kind: output, shape index: {}]
  %s3 = sld [smem:[#allocation0]]
  $region45: #{lstm_forward.1} parent=0
    _
  %s5 = ssub.s32 1, %s3
  %s6 = scalar_select 0, %s5, %s3
  $region1: #{lstm_forward.1} parent=0
    #allocation4 [shape = 'u8[8192]{0}', space=vmem, size = 0x2000, scoped, tag = 'output window, operand 0']
    #allocation5 [shape = 's32[2]{0}', space=sflag, size = 0x8, scoped, tag = 'scoped memory for lstm_forward.1']
    %7 = vsyncpa [#allocation5], 0
    %s8 = scalar_lea.sflag [#allocation5], 1
    %9 = vsyncpa %s8, 0
    loop: start=0, step=1, limit=4
    $region2: #{lstm_forward.1} parent=1 // loop_pre_header
      _
    $region3: #{lstm_forward.1} parent=1 // loop_header
      %s11 = sphi 0, %s15
      %p12 = scmp.ge.s32.totalorder %s11, 4
      %s18 = sphi 0, %s30
      %s19 = sphi 0, %s26
      %s20 = sphi 0, %s18
      %s21 = sphi 0, %s19
      %s22 = sphi 0, %s20
      %s23 = sphi 0, %s21
      %s35 = sphi 0, %s37
      %s38 = sphi 0, %s35
      %s39 = sphi 0, %s38
      %s55 = sphi 0, %s39
      %s59 = sphi 0, %s59
      %s61 = sphi 0, %s59
      %s62 = sphi 0, %s61
      %s76 = sphi 0, %s62
      %s84 = sphi 0, %s86
      %s87 = sphi 0, %s84
      %s88 = sphi 0, %s87
      %s104 = sphi 0, %s88
    $region4: #{lstm_forward.1} parent=1 // loop_header_branch
      %14 = sbr.rel (%p12) target = $region8
    $region5: #{lstm_forward.1} parent=1 // loop_body
      %s16 = ssub.s32 %s11, 1
      %s17 = ssub.s32 %s11, 2
      %s24 = sadd.s32 1, %s19
      %p25 = scmp.ge.s32.totalorder %s24, 1
      %s26 = scalar_select %p25, 0, %s24
      %s27 = sadd.s32 1, %s18
      %s28 = scalar_select %p25, %s27, %s18
      %p29 = scmp.ge.s32.totalorder %s28, 2
      %s30 = scalar_select %p29, 0, %s28
      %s31 = ssub.s32 %s18, %s30
      %s32 = ssub.s32 %s19, %s26
      %s33 = sor.u32 %s31, %s32
      %p34 = scmp.eq.s32.totalorder %s33, 0
      %s36 = sadd.s32 %s35, 1
      %s37 = scalar_select %p34, %s35, %s36
      %p40 = pneg %p34
      %p41 = scmp.eq.s32.totalorder %s11, 1
      %p42 = por %p40, %p41
      %p43 = scmp.ne.s32.totalorder %s35, %s38
      %p44 = scmp.eq.s32.totalorder %s11, 0
      %p45 = por %p43, %p44
      %p46 = scmp.ne.s32.totalorder %s35, %s38
      %p47 = scmp.eq.s32.totalorder %s16, 1
      %p48 = por %p46, %p47
      %p49 = scmp.ne.s32.totalorder %s38, %s39
      %p50 = scmp.eq.s32.totalorder %s16, 0
      %p51 = por %p49, %p50
      %p52 = scmp.ne.s32.totalorder %s38, %s39
      %p53 = scmp.eq.s32.totalorder %s17, 1
      %p54 = por %p52, %p53
      %p56 = scmp.ne.s32.totalorder %s39, %s55
      %p57 = scmp.eq.s32.totalorder %s17, 0
      %p58 = por %p56, %p57
      %s60 = sadd.s32 %s59, 1
      %p63 = scmp.eq.s32.totalorder %s11, 1
      %p64 = scmp.ne.s32.totalorder %s59, %s61
      %p65 = scmp.eq.s32.totalorder %s11, 0
      %p66 = por %p64, %p65
      %p67 = scmp.ne.s32.totalorder %s59, %s61
      %p68 = scmp.eq.s32.totalorder %s16, 1
      %p69 = por %p67, %p68
      %p70 = scmp.ne.s32.totalorder %s61, %s62
      %p71 = scmp.eq.s32.totalorder %s16, 0
      %p72 = por %p70, %p71
      %p73 = scmp.ne.s32.totalorder %s61, %s62
      %p74 = scmp.eq.s32.totalorder %s17, 1
      %p75 = por %p73, %p74
      %p77 = scmp.ne.s32.totalorder %s62, %s76
      %p78 = scmp.eq.s32.totalorder %s17, 0
      %p79 = por %p77, %p78
      %s80 = ssub.s32 %s18, %s30
      %s81 = ssub.s32 %s19, %s26
      %s82 = sor.u32 %s80, %s81
      %p83 = scmp.eq.s32.totalorder %s82, 0
      %s85 = sadd.s32 %s84, 1
      %s86 = scalar_select %p83, %s84, %s85
      %p89 = pneg %p83
      %p90 = scmp.eq.s32.totalorder %s11, 1
      %p91 = por %p89, %p90
      %p92 = scmp.ne.s32.totalorder %s84, %s87
      %p93 = scmp.eq.s32.totalorder %s11, 0
      %p94 = por %p92, %p93
      %p95 = scmp.ne.s32.totalorder %s84, %s87
      %p96 = scmp.eq.s32.totalorder %s16, 1
      %p97 = por %p95, %p96
      %p98 = scmp.ne.s32.totalorder %s87, %s88
      %p99 = scmp.eq.s32.totalorder %s16, 0
      %p100 = por %p98, %p99
      %p101 = scmp.ne.s32.totalorder %s87, %s88
      %p102 = scmp.eq.s32.totalorder %s17, 1
      %p103 = por %p101, %p102
      %p105 = scmp.ne.s32.totalorder %s88, %s104
      %p106 = scmp.eq.s32.totalorder %s17, 0
      %p107 = por %p105, %p106
      %p108 = scmp.le.s32.totalorder 1, %s11
      %p109 = scmp.lt.s32.totalorder %s11, 3
      %p110 = pnand %p108, %p109
      %p111 = pneg %p110
      // Predicated region
      $region9: #{lstm_forward.1} parent=5 // pred_check
        _
      $region10: #{lstm_forward.1} parent=5 // pred_check_branch
        %113 = sbr.rel (%p110) target = $region12
      $region11: #{lstm_forward.1} parent=5 // pred_region
        %s114 = ssub.s32 %s11, 1
        // Predicated region
        $region13: #{lstm_forward.1} parent=11 // pred_check
          %p115 = pneg %p72
        $region14: #{lstm_forward.1} parent=11 // pred_check_branch
          %117 = sbr.rel (%p115) target = $region16
        $region15: #{lstm_forward.1} parent=11 // pred_region
          _
        $region16: #{lstm_forward.1} parent=11 // pred_fallthru
          _
      $region12: #{lstm_forward.1} parent=5 // pred_fallthru
        _
      %p118 = scmp.lt.s32.totalorder %s11, 2
      // Predicated region
      $region17: #{lstm_forward.1} parent=5 // pred_check
        %p119 = pneg %p118
      $region18: #{lstm_forward.1} parent=5 // pred_check_branch
        %121 = sbr.rel (%p119) target = $region20
      $region19: #{lstm_forward.1} parent=5 // pred_region
        // Predicated region
        $region21: #{lstm_forward.1} parent=19 // pred_check
          %p122 = pneg %p45
        $region22: #{lstm_forward.1} parent=19 // pred_check_branch
          %124 = sbr.rel (%p122) target = $region24
        $region23: #{lstm_forward.1} parent=19 // pred_region
          %p125 = scmp.lt.s32.totalorder %s18, 1
          %s126 = scalar_select %p125, %s18, 1
          %p127 = scmp.lt.s32.totalorder %s19, 0
          %s128 = scalar_select %p127, %s19, 0
          %s129 = sadd.s32 %s128, %s126
          %s130 = smul.addr %s129, 8
          %s131 = scalar_lea.vmem %s0, %s130
        $region24: #{lstm_forward.1} parent=19 // pred_fallthru
          _
      $region20: #{lstm_forward.1} parent=5 // pred_fallthru
        _
      %p132 = scmp.le.s32.totalorder 1, %s11
      %p133 = scmp.lt.s32.totalorder %s11, 3
      %p134 = pnand %p132, %p133
      %p135 = pneg %p134
      // Predicated region
      $region25: #{lstm_forward.1} parent=5 // pred_check
        _
      $region26: #{lstm_forward.1} parent=5 // pred_check_branch
        %137 = sbr.rel (%p134) target = $region28
      $region27: #{lstm_forward.1} parent=5 // pred_region
        %s138 = ssub.s32 %s11, 1
        %p139 = scmp.lt.s32.totalorder %s20, 1
        %s140 = scalar_select %p139, %s20, 1
        %p141 = scmp.lt.s32.totalorder %s21, 0
        %s142 = scalar_select %p141, %s21, 0
        %s143 = sadd.s32 %s142, %s140
        %s144 = smul.addr %s143, 8
        %s145 = scalar_lea.vmem %s0, %s144
        %p146 = pneg %p51
        %p147 = pneg %p48
        %p148 = pneg %p72
        %p149 = pneg %p69
        %p150 = pneg %p100
        %p151 = pneg %p97
        %s152 = sand.u32 %s87, 1
        %s153 = scalar_lea.sflag [#allocation5], %s152
        %s154 = sand.u32 %s87, 1
        %s155 = smul.addr %s154, 8
        %s156 = scalar_lea.vmem [#allocation4], %s155
        %p157 = scmp.lt.s32.totalorder %s20, 1
        %s158 = scalar_select %p157, %s20, 1
        %p159 = scmp.lt.s32.totalorder %s21, 0
        %s160 = scalar_select %p159, %s21, 0
        %s161 = sadd.s32 %s160, %s158
        %s162 = smul.addr %s161, 8
        %s163 = scalar_lea.vmem %s0, %s162
        %p165 = scmp.eq.s32.totalorder %s21, 0
        // Predicated region
        $region29: #{lstm_forward.1} parent=27 // pred_check
          %p166 = pneg %p165
        $region30: #{lstm_forward.1} parent=27 // pred_check_branch
          %168 = sbr.rel (%p166) target = $region32
        $region31: #{lstm_forward.1} parent=27 // pred_region
          %vm169 = vcmask 253952
          %170 = vst.msk [vmem:[#allocation2] sm:$0x1] %vm169, 0.0
          %171 = vst.msk [vmem:[#allocation3] sm:$0x1] %vm169, 0.0
        $region32: #{lstm_forward.1} parent=27 // pred_fallthru
          _
        %v172 = vld [vmem:[%s1] sm:$0xf]
        %v173 = vld [vmem:[%s1 + $0x4] sm:$0xf]
        %v174 = vld [vmem:[%s1 + $0x8] sm:$0xf]
        %v175 = vld [vmem:[%s1 + $0xc] sm:$0xf]
        %v176 = vld [vmem:[#allocation2] sm:$0x1]
        %v177 = vld [vmem:[#allocation3] sm:$0x1]
        %v178 = vld [vmem:[%s163] sm:$0x1]
        %v179 = vpack.c.bf16 %v176, %v176
        %v184 = vunpack.c.l.b16 %v172
        %v185 = vunpack.c.l.b16 %v173
        %v186 = vunpack.c.l.b16 %v174
        %v187 = vunpack.c.l.b16 %v175
        %v188 = vpack.c.b16 %v185, %v184
        %v189 = vpack.c.b16 %v187, %v186
        %vm192 = vcmask 261120
        %v194 = vsel %vm192, %v179, 0
        %196 = vmatprep.subr.bf16.mxu0 0
        %197 = vmatpush1.bf16.msra.mxu0 0
        %198 = vmatprep.subr.bf16.mxu0 0
        %199 = vmatpush1.bf16.msra.mxu0 0
        %200 = vmatprep.subr.bf16.mxu0 0
        %201 = vmatpush1.bf16.msra.mxu0 0
        %202 = vmatprep.subr.bf16.mxu0 0
        %203 = vmatpush1.bf16.msra.mxu0 0
        %204 = vmatprep.subr.bf16.mxu0 0
        %205 = vmatpush1.bf16.msra.mxu0 0
        %206 = vmatprep.subr.bf16.mxu0 0
        %207 = vmatpush1.bf16.msra.mxu0 0
        %208 = vmatprep.subr.bf16.mxu0 0
        %209 = vmatpush1.bf16.msra.mxu0 %v189
        %210 = vmatprep.subr.bf16.mxu0 0
        %211 = vmatpush1.bf16.msra.mxu0 %v188
        %212 = vmatprep.subr.bf16.mxu0 0
        %213 = vmatpush2.bf16.msra.mxu0 0
        %214 = vmatprep.subr.bf16.mxu0 0
        %215 = vmatpush2.bf16.msra.mxu0 0
        %216 = vmatprep.subr.bf16.mxu0 0
        %217 = vmatpush2.bf16.msra.mxu0 0
        %218 = vmatprep.subr.bf16.mxu0 0
        %219 = vmatpush2.bf16.msra.mxu0 0
        %220 = vmatprep.subr.bf16.mxu0 0
        %221 = vmatpush2.bf16.msra.mxu0 0
        %222 = vmatprep.subr.bf16.mxu0 0
        %223 = vmatpush2.bf16.msra.mxu0 0
        %224 = vmatprep.subr.bf16.mxu0 0
        %225 = vmatpush2.bf16.msra.mxu0 0
        %226 = vmatprep.subr.bf16.mxu0 0
        %227 = vmatpush2.bf16.msra.mxu0 0
        %228 = vmatprep.mubr.bf16.mxu0 0
        %229 = vmatmul.mubr.bf16.gmra.mxu0 %v194
        %v230 = vpop.f32.mrf.mxu0
        %v231 = vadd.f32 0.0, %v230
        %v232 = vpop.f32.mrf.mxu0
        %v233 = vpop.f32.mrf.mxu0
        %v234 = vpop.f32.mrf.mxu0
        %235 = vdwg.mxu0
        %v236 = vadd.f32 %v178, %v231
        %v237 = vsub.f32 0.0, %v236
        %v238 = vmul.f32 %v237, 1.442695
        %v239 = vpow.pop %v238
        %v240 = vadd.f32 %v239, 1.0
        %v241 = vrcp.pop %v240
        %v242 = vtanh.pop %v236
        %v244 = vlaneseq
        %v245 = vshrl.u32 %v244, 7
        %v246 = vsub.s32 0, %v245
        %v247 = vrot.slane %v177, %v246
        %248 = vrot.lane.b32.xlu0 %v247, 32
        %v249 = vpop.permute.xlu0 %248
        %v251 = vmul.f32 %v241, %v249
        %253 = vrot.lane.b32.xlu0 %v242, 64
        %v254 = vpop.permute.xlu0 %253
        %v256 = vmul.f32 %v241, %v254
        %258 = vrot.lane.b32.xlu0 %v256, 32
        %v259 = vpop.permute.xlu0 %258
        %v261 = vadd.f32 %v251, %v259
        %v262 = vtanh.pop %v261
        %264 = vrot.lane.b32.xlu0 %v262, 64
        %v265 = vpop.permute.xlu0 %264
        %v267 = vmul.f32 %v241, %v265
        %269 = vrot.lane.b32.xlu0 %v267, 32
        %v270 = vpop.permute.xlu0 %269
        %vm272 = vcmask 253952
        %273 = vst.msk [vmem:[%s156] sm:$0x1] %vm272, %v270
        %v274 = vld [vmem:[%s163 + $0x1] sm:$0x1]
        %v275 = vpack.c.bf16 %v267, %v267
        %277 = vrot.lane.b32.xlu0 %v275, 32
        %v278 = vpop.permute.xlu0 %277
        %v280 = vsel %vm192, %v278, 0
        %282 = vmatprep.subr.bf16.mxu0 0
        %283 = vmatpush1.bf16.msra.mxu0 0
        %284 = vmatprep.subr.bf16.mxu0 0
        %285 = vmatpush1.bf16.msra.mxu0 0
        %286 = vmatprep.subr.bf16.mxu0 0
        %287 = vmatpush1.bf16.msra.mxu0 0
        %288 = vmatprep.subr.bf16.mxu0 0
        %289 = vmatpush1.bf16.msra.mxu0 0
        %290 = vmatprep.subr.bf16.mxu0 0
        %291 = vmatpush1.bf16.msra.mxu0 0
        %292 = vmatprep.subr.bf16.mxu0 0
        %293 = vmatpush1.bf16.msra.mxu0 0
        %294 = vmatprep.subr.bf16.mxu0 0
        %295 = vmatpush1.bf16.msra.mxu0 %v189
        %296 = vmatprep.subr.bf16.mxu0 0
        %297 = vmatpush1.bf16.msra.mxu0 %v188
        %298 = vmatprep.subr.bf16.mxu0 0
        %299 = vmatpush2.bf16.msra.mxu0 0
        %300 = vmatprep.subr.bf16.mxu0 0
        %301 = vmatpush2.bf16.msra.mxu0 0
        %302 = vmatprep.subr.bf16.mxu0 0
        %303 = vmatpush2.bf16.msra.mxu0 0
        %304 = vmatprep.subr.bf16.mxu0 0
        %305 = vmatpush2.bf16.msra.mxu0 0
        %306 = vmatprep.subr.bf16.mxu0 0
        %307 = vmatpush2.bf16.msra.mxu0 0
        %308 = vmatprep.subr.bf16.mxu0 0
        %309 = vmatpush2.bf16.msra.mxu0 0
        %310 = vmatprep.subr.bf16.mxu0 0
        %311 = vmatpush2.bf16.msra.mxu0 0
        %312 = vmatprep.subr.bf16.mxu0 0
        %313 = vmatpush2.bf16.msra.mxu0 0
        %314 = vmatprep.mubr.bf16.mxu0 0
        %315 = vmatmul.mubr.bf16.gmra.mxu0 %v280
        %v316 = vpop.f32.mrf.mxu0
        %v317 = vadd.f32 0.0, %v316
        %v318 = vpop.f32.mrf.mxu0
        %v319 = vpop.f32.mrf.mxu0
        %v320 = vpop.f32.mrf.mxu0
        %321 = vdwg.mxu0
        %v322 = vadd.f32 %v274, %v317
        %v323 = vsub.f32 0.0, %v322
        %v324 = vmul.f32 %v323, 1.442695
        %v325 = vpow.pop %v324
        %v326 = vadd.f32 %v325, 1.0
        %v327 = vrcp.pop %v326
        %v328 = vtanh.pop %v322
        %v329 = vmul.f32 %v327, %v261
        %331 = vrot.lane.b32.xlu0 %v328, 64
        %v332 = vpop.permute.xlu0 %331
        %v334 = vmul.f32 %v327, %v332
        %336 = vrot.lane.b32.xlu0 %v334, 32
        %v337 = vpop.permute.xlu0 %336
        %v339 = vadd.f32 %v329, %v337
        %v340 = vtanh.pop %v339
        %342 = vrot.lane.b32.xlu0 %v340, 64
        %v343 = vpop.permute.xlu0 %342
        %v345 = vmul.f32 %v327, %v343
        %347 = vrot.lane.b32.xlu0 %v345, 32
        %v348 = vpop.permute.xlu0 %347
        %350 = vst.msk [vmem:[%s156 + $0x1] sm:$0x1] %vm272, %v348
        %v351 = vld [vmem:[%s163 + $0x2] sm:$0x1]
        %v352 = vpack.c.bf16 %v345, %v345
        %354 = vrot.lane.b32.xlu0 %v352, 32
        %v355 = vpop.permute.xlu0 %354
        %v357 = vsel %vm192, %v355, 0
        %359 = vmatprep.subr.bf16.mxu0 0
        %360 = vmatpush1.bf16.msra.mxu0 0
        %361 = vmatprep.subr.bf16.mxu0 0
        %362 = vmatpush1.bf16.msra.mxu0 0
        %363 = vmatprep.subr.bf16.mxu0 0
        %364 = vmatpush1.bf16.msra.mxu0 0
        %365 = vmatprep.subr.bf16.mxu0 0
        %366 = vmatpush1.bf16.msra.mxu0 0
        %367 = vmatprep.subr.bf16.mxu0 0
        %368 = vmatpush1.bf16.msra.mxu0 0
        %369 = vmatprep.subr.bf16.mxu0 0
        %370 = vmatpush1.bf16.msra.mxu0 0
        %371 = vmatprep.subr.bf16.mxu0 0
        %372 = vmatpush1.bf16.msra.mxu0 %v189
        %373 = vmatprep.subr.bf16.mxu0 0
        %374 = vmatpush1.bf16.msra.mxu0 %v188
        %375 = vmatprep.subr.bf16.mxu0 0
        %376 = vmatpush2.bf16.msra.mxu0 0
        %377 = vmatprep.subr.bf16.mxu0 0
        %378 = vmatpush2.bf16.msra.mxu0 0
        %379 = vmatprep.subr.bf16.mxu0 0
        %380 = vmatpush2.bf16.msra.mxu0 0
        %381 = vmatprep.subr.bf16.mxu0 0
        %382 = vmatpush2.bf16.msra.mxu0 0
        %383 = vmatprep.subr.bf16.mxu0 0
        %384 = vmatpush2.bf16.msra.mxu0 0
        %385 = vmatprep.subr.bf16.mxu0 0
        %386 = vmatpush2.bf16.msra.mxu0 0
        %387 = vmatprep.subr.bf16.mxu0 0
        %388 = vmatpush2.bf16.msra.mxu0 0
        %389 = vmatprep.subr.bf16.mxu0 0
        %390 = vmatpush2.bf16.msra.mxu0 0
        %391 = vmatprep.mubr.bf16.mxu0 0
        %392 = vmatmul.mubr.bf16.gmra.mxu0 %v357
        %v393 = vpop.f32.mrf.mxu0
        %v394 = vadd.f32 0.0, %v393
        %v395 = vpop.f32.mrf.mxu0
        %v396 = vpop.f32.mrf.mxu0
        %v397 = vpop.f32.mrf.mxu0
        %398 = vdwg.mxu0
        %v399 = vadd.f32 %v351, %v394
        %v400 = vsub.f32 0.0, %v399
        %v401 = vmul.f32 %v400, 1.442695
        %v402 = vpow.pop %v401
        %v403 = vadd.f32 %v402, 1.0
        %v404 = vrcp.pop %v403
        %v405 = vtanh.pop %v399
        %v406 = vmul.f32 %v404, %v339
        %408 = vrot.lane.b32.xlu0 %v405, 64
        %v409 = vpop.permute.xlu0 %408
        %v411 = vmul.f32 %v404, %v409
        %413 = vrot.lane.b32.xlu0 %v411, 32
        %v414 = vpop.permute.xlu0 %413
        %v416 = vadd.f32 %v406, %v414
        %v417 = vtanh.pop %v416
        %419 = vrot.lane.b32.xlu0 %v417, 64
        %v420 = vpop.permute.xlu0 %419
        %v422 = vmul.f32 %v404, %v420
        %424 = vrot.lane.b32.xlu0 %v422, 32
        %v425 = vpop.permute.xlu0 %424
        %427 = vst.msk [vmem:[%s156 + $0x2] sm:$0x1] %vm272, %v425
        %v428 = vld [vmem:[%s163 + $0x3] sm:$0x1]
        %v429 = vpack.c.bf16 %v422, %v422
        %431 = vrot.lane.b32.xlu0 %v429, 32
        %v432 = vpop.permute.xlu0 %431
        %v434 = vsel %vm192, %v432, 0
        %436 = vmatprep.subr.bf16.mxu0 0
        %437 = vmatpush1.bf16.msra.mxu0 0
        %438 = vmatprep.subr.bf16.mxu0 0
        %439 = vmatpush1.bf16.msra.mxu0 0
        %440 = vmatprep.subr.bf16.mxu0 0
        %441 = vmatpush1.bf16.msra.mxu0 0
        %442 = vmatprep.subr.bf16.mxu0 0
        %443 = vmatpush1.bf16.msra.mxu0 0
        %444 = vmatprep.subr.bf16.mxu0 0
        %445 = vmatpush1.bf16.msra.mxu0 0
        %446 = vmatprep.subr.bf16.mxu0 0
        %447 = vmatpush1.bf16.msra.mxu0 0
        %448 = vmatprep.subr.bf16.mxu0 0
        %449 = vmatpush1.bf16.msra.mxu0 %v189
        %450 = vmatprep.subr.bf16.mxu0 0
        %451 = vmatpush1.bf16.msra.mxu0 %v188
        %452 = vmatprep.subr.bf16.mxu0 0
        %453 = vmatpush2.bf16.msra.mxu0 0
        %454 = vmatprep.subr.bf16.mxu0 0
        %455 = vmatpush2.bf16.msra.mxu0 0
        %456 = vmatprep.subr.bf16.mxu0 0
        %457 = vmatpush2.bf16.msra.mxu0 0
        %458 = vmatprep.subr.bf16.mxu0 0
        %459 = vmatpush2.bf16.msra.mxu0 0
        %460 = vmatprep.subr.bf16.mxu0 0
        %461 = vmatpush2.bf16.msra.mxu0 0
        %462 = vmatprep.subr.bf16.mxu0 0
        %463 = vmatpush2.bf16.msra.mxu0 0
        %464 = vmatprep.subr.bf16.mxu0 0
        %465 = vmatpush2.bf16.msra.mxu0 0
        %466 = vmatprep.subr.bf16.mxu0 0
        %467 = vmatpush2.bf16.msra.mxu0 0
        %468 = vmatprep.mubr.bf16.mxu0 0
        %469 = vmatmul.mubr.bf16.gmra.mxu0 %v434
        %v470 = vpop.f32.mrf.mxu0
        %v471 = vadd.f32 0.0, %v470
        %v472 = vpop.f32.mrf.mxu0
        %v473 = vpop.f32.mrf.mxu0
        %v474 = vpop.f32.mrf.mxu0
        %475 = vdwg.mxu0
        %v476 = vadd.f32 %v428, %v471
        %v477 = vsub.f32 0.0, %v476
        %v478 = vmul.f32 %v477, 1.442695
        %v479 = vpow.pop %v478
        %v480 = vadd.f32 %v479, 1.0
        %v481 = vrcp.pop %v480
        %v482 = vtanh.pop %v476
        %v483 = vmul.f32 %v481, %v416
        %485 = vrot.lane.b32.xlu0 %v482, 64
        %v486 = vpop.permute.xlu0 %485
        %v488 = vmul.f32 %v481, %v486
        %490 = vrot.lane.b32.xlu0 %v488, 32
        %v491 = vpop.permute.xlu0 %490
        %v493 = vadd.f32 %v483, %v491
        %v494 = vtanh.pop %v493
        %496 = vrot.lane.b32.xlu0 %v494, 64
        %v497 = vpop.permute.xlu0 %496
        %v499 = vmul.f32 %v481, %v497
        %501 = vrot.lane.b32.xlu0 %v499, 32
        %v502 = vpop.permute.xlu0 %501
        %504 = vst.msk [vmem:[%s156 + $0x3] sm:$0x1] %vm272, %v502
        %v505 = vld [vmem:[%s163 + $0x4] sm:$0x1]
        %v506 = vpack.c.bf16 %v499, %v499
        %508 = vrot.lane.b32.xlu0 %v506, 32
        %v509 = vpop.permute.xlu0 %508
        %v511 = vsel %vm192, %v509, 0
        %513 = vmatprep.subr.bf16.mxu0 0
        %514 = vmatpush1.bf16.msra.mxu0 0
        %515 = vmatprep.subr.bf16.mxu0 0
        %516 = vmatpush1.bf16.msra.mxu0 0
        %517 = vmatprep.subr.bf16.mxu0 0
        %518 = vmatpush1.bf16.msra.mxu0 0
        %519 = vmatprep.subr.bf16.mxu0 0
        %520 = vmatpush1.bf16.msra.mxu0 0
        %521 = vmatprep.subr.bf16.mxu0 0
        %522 = vmatpush1.bf16.msra.mxu0 0
        %523 = vmatprep.subr.bf16.mxu0 0
        %524 = vmatpush1.bf16.msra.mxu0 0
        %525 = vmatprep.subr.bf16.mxu0 0
        %526 = vmatpush1.bf16.msra.mxu0 %v189
        %527 = vmatprep.subr.bf16.mxu0 0
        %528 = vmatpush1.bf16.msra.mxu0 %v188
        %529 = vmatprep.subr.bf16.mxu0 0
        %530 = vmatpush2.bf16.msra.mxu0 0
        %531 = vmatprep.subr.bf16.mxu0 0
        %532 = vmatpush2.bf16.msra.mxu0 0
        %533 = vmatprep.subr.bf16.mxu0 0
        %534 = vmatpush2.bf16.msra.mxu0 0
        %535 = vmatprep.subr.bf16.mxu0 0
        %536 = vmatpush2.bf16.msra.mxu0 0
        %537 = vmatprep.subr.bf16.mxu0 0
        %538 = vmatpush2.bf16.msra.mxu0 0
        %539 = vmatprep.subr.bf16.mxu0 0
        %540 = vmatpush2.bf16.msra.mxu0 0
        %541 = vmatprep.subr.bf16.mxu0 0
        %542 = vmatpush2.bf16.msra.mxu0 0
        %543 = vmatprep.subr.bf16.mxu0 0
        %544 = vmatpush2.bf16.msra.mxu0 0
        %545 = vmatprep.mubr.bf16.mxu0 0
        %546 = vmatmul.mubr.bf16.gmra.mxu0 %v511
        %v547 = vpop.f32.mrf.mxu0
        %v548 = vadd.f32 0.0, %v547
        %v549 = vpop.f32.mrf.mxu0
        %v550 = vpop.f32.mrf.mxu0
        %v551 = vpop.f32.mrf.mxu0
        %552 = vdwg.mxu0
        %v553 = vadd.f32 %v505, %v548
        %v554 = vsub.f32 0.0, %v553
        %v555 = vmul.f32 %v554, 1.442695
        %v556 = vpow.pop %v555
        %v557 = vadd.f32 %v556, 1.0
        %v558 = vrcp.pop %v557
        %v559 = vtanh.pop %v553
        %v560 = vmul.f32 %v558, %v493
        %562 = vrot.lane.b32.xlu0 %v559, 64
        %v563 = vpop.permute.xlu0 %562
        %v565 = vmul.f32 %v558, %v563
        %567 = vrot.lane.b32.xlu0 %v565, 32
        %v568 = vpop.permute.xlu0 %567
        %v570 = vadd.f32 %v560, %v568
        %v571 = vtanh.pop %v570
        %573 = vrot.lane.b32.xlu0 %v571, 64
        %v574 = vpop.permute.xlu0 %573
        %v576 = vmul.f32 %v558, %v574
        %578 = vrot.lane.b32.xlu0 %v576, 32
        %v579 = vpop.permute.xlu0 %578
        %581 = vst.msk [vmem:[%s156 + $0x4] sm:$0x1] %vm272, %v579
        %v582 = vld [vmem:[%s163 + $0x5] sm:$0x1]
        %v583 = vpack.c.bf16 %v576, %v576
        %585 = vrot.lane.b32.xlu0 %v583, 32
        %v586 = vpop.permute.xlu0 %585
        %v588 = vsel %vm192, %v586, 0
        %590 = vmatprep.subr.bf16.mxu0 0
        %591 = vmatpush1.bf16.msra.mxu0 0
        %592 = vmatprep.subr.bf16.mxu0 0
        %593 = vmatpush1.bf16.msra.mxu0 0
        %594 = vmatprep.subr.bf16.mxu0 0
        %595 = vmatpush1.bf16.msra.mxu0 0
        %596 = vmatprep.subr.bf16.mxu0 0
        %597 = vmatpush1.bf16.msra.mxu0 0
        %598 = vmatprep.subr.bf16.mxu0 0
        %599 = vmatpush1.bf16.msra.mxu0 0
        %600 = vmatprep.subr.bf16.mxu0 0
        %601 = vmatpush1.bf16.msra.mxu0 0
        %602 = vmatprep.subr.bf16.mxu0 0
        %603 = vmatpush1.bf16.msra.mxu0 %v189
        %604 = vmatprep.subr.bf16.mxu0 0
        %605 = vmatpush1.bf16.msra.mxu0 %v188
        %606 = vmatprep.subr.bf16.mxu0 0
        %607 = vmatpush2.bf16.msra.mxu0 0
        %608 = vmatprep.subr.bf16.mxu0 0
        %609 = vmatpush2.bf16.msra.mxu0 0
        %610 = vmatprep.subr.bf16.mxu0 0
        %611 = vmatpush2.bf16.msra.mxu0 0
        %612 = vmatprep.subr.bf16.mxu0 0
        %613 = vmatpush2.bf16.msra.mxu0 0
        %614 = vmatprep.subr.bf16.mxu0 0
        %615 = vmatpush2.bf16.msra.mxu0 0
        %616 = vmatprep.subr.bf16.mxu0 0
        %617 = vmatpush2.bf16.msra.mxu0 0
        %618 = vmatprep.subr.bf16.mxu0 0
        %619 = vmatpush2.bf16.msra.mxu0 0
        %620 = vmatprep.subr.bf16.mxu0 0
        %621 = vmatpush2.bf16.msra.mxu0 0
        %622 = vmatprep.mubr.bf16.mxu0 0
        %623 = vmatmul.mubr.bf16.gmra.mxu0 %v588
        %v624 = vpop.f32.mrf.mxu0
        %v625 = vadd.f32 0.0, %v624
        %v626 = vpop.f32.mrf.mxu0
        %v627 = vpop.f32.mrf.mxu0
        %v628 = vpop.f32.mrf.mxu0
        %629 = vdwg.mxu0
        %v630 = vadd.f32 %v582, %v625
        %v631 = vsub.f32 0.0, %v630
        %v632 = vmul.f32 %v631, 1.442695
        %v633 = vpow.pop %v632
        %v634 = vadd.f32 %v633, 1.0
        %v635 = vrcp.pop %v634
        %v636 = vtanh.pop %v630
        %v637 = vmul.f32 %v635, %v570
        %639 = vrot.lane.b32.xlu0 %v636, 64
        %v640 = vpop.permute.xlu0 %639
        %v642 = vmul.f32 %v635, %v640
        %644 = vrot.lane.b32.xlu0 %v642, 32
        %v645 = vpop.permute.xlu0 %644
        %v647 = vadd.f32 %v637, %v645
        %v648 = vtanh.pop %v647
        %650 = vrot.lane.b32.xlu0 %v648, 64
        %v651 = vpop.permute.xlu0 %650
        %v653 = vmul.f32 %v635, %v651
        %655 = vrot.lane.b32.xlu0 %v653, 32
        %v656 = vpop.permute.xlu0 %655
        %658 = vst.msk [vmem:[%s156 + $0x5] sm:$0x1] %vm272, %v656
        %v659 = vld [vmem:[%s163 + $0x6] sm:$0x1]
        %v660 = vpack.c.bf16 %v653, %v653
        %662 = vrot.lane.b32.xlu0 %v660, 32
        %v663 = vpop.permute.xlu0 %662
        %v665 = vsel %vm192, %v663, 0
        %667 = vmatprep.subr.bf16.mxu0 0
        %668 = vmatpush1.bf16.msra.mxu0 0
        %669 = vmatprep.subr.bf16.mxu0 0
        %670 = vmatpush1.bf16.msra.mxu0 0
        %671 = vmatprep.subr.bf16.mxu0 0
        %672 = vmatpush1.bf16.msra.mxu0 0
        %673 = vmatprep.subr.bf16.mxu0 0
        %674 = vmatpush1.bf16.msra.mxu0 0
        %675 = vmatprep.subr.bf16.mxu0 0
        %676 = vmatpush1.bf16.msra.mxu0 0
        %677 = vmatprep.subr.bf16.mxu0 0
        %678 = vmatpush1.bf16.msra.mxu0 0
        %679 = vmatprep.subr.bf16.mxu0 0
        %680 = vmatpush1.bf16.msra.mxu0 %v189
        %681 = vmatprep.subr.bf16.mxu0 0
        %682 = vmatpush1.bf16.msra.mxu0 %v188
        %683 = vmatprep.subr.bf16.mxu0 0
        %684 = vmatpush2.bf16.msra.mxu0 0
        %685 = vmatprep.subr.bf16.mxu0 0
        %686 = vmatpush2.bf16.msra.mxu0 0
        %687 = vmatprep.subr.bf16.mxu0 0
        %688 = vmatpush2.bf16.msra.mxu0 0
        %689 = vmatprep.subr.bf16.mxu0 0
        %690 = vmatpush2.bf16.msra.mxu0 0
        %691 = vmatprep.subr.bf16.mxu0 0
        %692 = vmatpush2.bf16.msra.mxu0 0
        %693 = vmatprep.subr.bf16.mxu0 0
        %694 = vmatpush2.bf16.msra.mxu0 0
        %695 = vmatprep.subr.bf16.mxu0 0
        %696 = vmatpush2.bf16.msra.mxu0 0
        %697 = vmatprep.subr.bf16.mxu0 0
        %698 = vmatpush2.bf16.msra.mxu0 0
        %699 = vmatprep.mubr.bf16.mxu0 0
        %700 = vmatmul.mubr.bf16.gmra.mxu0 %v665
        %v701 = vpop.f32.mrf.mxu0
        %v702 = vadd.f32 0.0, %v701
        %v703 = vpop.f32.mrf.mxu0
        %v704 = vpop.f32.mrf.mxu0
        %v705 = vpop.f32.mrf.mxu0
        %706 = vdwg.mxu0
        %v707 = vadd.f32 %v659, %v702
        %v708 = vsub.f32 0.0, %v707
        %v709 = vmul.f32 %v708, 1.442695
        %v710 = vpow.pop %v709
        %v711 = vadd.f32 %v710, 1.0
        %v712 = vrcp.pop %v711
        %v713 = vtanh.pop %v707
        %v714 = vmul.f32 %v712, %v647
        %716 = vrot.lane.b32.xlu0 %v713, 64
        %v717 = vpop.permute.xlu0 %716
        %v719 = vmul.f32 %v712, %v717
        %721 = vrot.lane.b32.xlu0 %v719, 32
        %v722 = vpop.permute.xlu0 %721
        %v724 = vadd.f32 %v714, %v722
        %v725 = vtanh.pop %v724
        %727 = vrot.lane.b32.xlu0 %v725, 64
        %v728 = vpop.permute.xlu0 %727
        %v730 = vmul.f32 %v712, %v728
        %732 = vrot.lane.b32.xlu0 %v730, 32
        %v733 = vpop.permute.xlu0 %732
        %735 = vst.msk [vmem:[%s156 + $0x6] sm:$0x1] %vm272, %v733
        %v736 = vld [vmem:[%s163 + $0x7] sm:$0x1]
        %v737 = vpack.c.bf16 %v730, %v730
        %739 = vrot.lane.b32.xlu0 %v737, 32
        %v740 = vpop.permute.xlu0 %739
        %v742 = vsel %vm192, %v740, 0
        %744 = vmatprep.subr.bf16.mxu0 0
        %745 = vmatpush1.bf16.msra.mxu0 0
        %746 = vmatprep.subr.bf16.mxu0 0
        %747 = vmatpush1.bf16.msra.mxu0 0
        %748 = vmatprep.subr.bf16.mxu0 0
        %749 = vmatpush1.bf16.msra.mxu0 0
        %750 = vmatprep.subr.bf16.mxu0 0
        %751 = vmatpush1.bf16.msra.mxu0 0
        %752 = vmatprep.subr.bf16.mxu0 0
        %753 = vmatpush1.bf16.msra.mxu0 0
        %754 = vmatprep.subr.bf16.mxu0 0
        %755 = vmatpush1.bf16.msra.mxu0 0
        %756 = vmatprep.subr.bf16.mxu0 0
        %757 = vmatpush1.bf16.msra.mxu0 %v189
        %758 = vmatprep.subr.bf16.mxu0 0
        %759 = vmatpush1.bf16.msra.mxu0 %v188
        %760 = vmatprep.subr.bf16.mxu0 0
        %761 = vmatpush2.bf16.msra.mxu0 0
        %762 = vmatprep.subr.bf16.mxu0 0
        %763 = vmatpush2.bf16.msra.mxu0 0
        %764 = vmatprep.subr.bf16.mxu0 0
        %765 = vmatpush2.bf16.msra.mxu0 0
        %766 = vmatprep.subr.bf16.mxu0 0
        %767 = vmatpush2.bf16.msra.mxu0 0
        %768 = vmatprep.subr.bf16.mxu0 0
        %769 = vmatpush2.bf16.msra.mxu0 0
        %770 = vmatprep.subr.bf16.mxu0 0
        %771 = vmatpush2.bf16.msra.mxu0 0
        %772 = vmatprep.subr.bf16.mxu0 0
        %773 = vmatpush2.bf16.msra.mxu0 0
        %774 = vmatprep.subr.bf16.mxu0 0
        %775 = vmatpush2.bf16.msra.mxu0 0
        %776 = vmatprep.mubr.bf16.mxu0 0
        %777 = vmatmul.mubr.bf16.gmra.mxu0 %v742
        %v778 = vpop.f32.mrf.mxu0
        %v779 = vadd.f32 0.0, %v778
        %v780 = vpop.f32.mrf.mxu0
        %v781 = vpop.f32.mrf.mxu0
        %v782 = vpop.f32.mrf.mxu0
        %783 = vdwg.mxu0
        %v784 = vadd.f32 %v736, %v779
        %v785 = vsub.f32 0.0, %v784
        %v786 = vmul.f32 %v785, 1.442695
        %v787 = vpow.pop %v786
        %v788 = vadd.f32 %v787, 1.0
        %v789 = vrcp.pop %v788
        %v790 = vtanh.pop %v784
        %v791 = vmul.f32 %v789, %v724
        %793 = vrot.lane.b32.xlu0 %v790, 64
        %v794 = vpop.permute.xlu0 %793
        %v796 = vmul.f32 %v789, %v794
        %798 = vrot.lane.b32.xlu0 %v796, 32
        %v799 = vpop.permute.xlu0 %798
        %v801 = vadd.f32 %v791, %v799
        %v802 = vtanh.pop %v801
        %804 = vrot.lane.b32.xlu0 %v802, 64
        %v805 = vpop.permute.xlu0 %804
        %v807 = vmul.f32 %v789, %v805
        %809 = vrot.lane.b32.xlu0 %v807, 32
        %v810 = vpop.permute.xlu0 %809
        %812 = vst.msk [vmem:[%s156 + $0x7] sm:$0x1] %vm272, %v810
        %813 = vst.msk [vmem:[#allocation2] sm:$0x1] %vm272, %v810
        %815 = vrot.lane.b32.xlu0 %v801, 96
        %v816 = vpop.permute.xlu0 %815
        %818 = vst.msk [vmem:[#allocation3] sm:$0x1] %vm272, %v816
        %s819 = sand.u32 %s87, 1
        %s820 = scalar_lea.sflag [#allocation5], %s819
        %s821 = sand.u32 %s87, 1
        %s822 = smul.addr %s821, 8
        %s823 = scalar_lea.vmem [#allocation4], %s822
        // Predicated region
        $region33: #{lstm_forward.1} parent=27 // pred_check
          %p824 = pneg %p97
        $region34: #{lstm_forward.1} parent=27 // pred_check_branch
          %826 = sbr.rel (%p824) target = $region36
        $region35: #{lstm_forward.1} parent=27 // pred_region
          %s828 = ssub.s32 128, 128
          %829 = vsyncadd %s820, %s828
          %s830 = sadd.s32 %s21, %s20
          %s831 = smul.addr %s830, 128
          %s832 = scalar_lea.hbm %s2, %s831
          %s834 = sshll.u32 %s823, 4
          %s835 = int_to_ptr.vmem [resolvable:$true] %s834
          %837 = dma.vmem_to_hbm [thread:$0]  %s835, 128, %s832, %s820
        $region36: #{lstm_forward.1} parent=27 // pred_fallthru
          _
      $region28: #{lstm_forward.1} parent=5 // pred_fallthru
        _
      %p838 = scmp.le.s32.totalorder 2, %s11
      // Predicated region
      $region37: #{lstm_forward.1} parent=5 // pred_check
        %p839 = pneg %p838
      $region38: #{lstm_forward.1} parent=5 // pred_check_branch
        %841 = sbr.rel (%p839) target = $region40
      $region39: #{lstm_forward.1} parent=5 // pred_region
        %s842 = ssub.s32 %s11, 2
        // Predicated region
        $region41: #{lstm_forward.1} parent=39 // pred_check
          %p843 = pneg %p103
        $region42: #{lstm_forward.1} parent=39 // pred_check_branch
          %845 = sbr.rel (%p843) target = $region44
        $region43: #{lstm_forward.1} parent=39 // pred_region
          %s846 = sand.u32 %s88, 1
          %s847 = scalar_lea.sflag [#allocation5], %s846
          %s848 = sand.u32 %s88, 1
          %s849 = smul.addr %s848, 8
          %s850 = scalar_lea.vmem [#allocation4], %s849
          %851 = dma.done %s847, 128
        $region44: #{lstm_forward.1} parent=39 // pred_fallthru
          _
      $region40: #{lstm_forward.1} parent=5 // pred_fallthru
        _
    $region6: #{lstm_forward.1} parent=1 // loop_footer
      %s15 = sadd.s32 1, %s11
    $region7: #{lstm_forward.1} parent=1 // loop_footer_branch
      %10 = sbr.rel target = $region3
    $region8: #{lstm_forward.1} parent=1 // loop_exit
      _
    %852 = vsyncpa [#allocation5], 1
    %s853 = scalar_lea.sflag [#allocation5], 1
    %854 = vsyncpa %s853, 1

</llo_original>
